<compile_context>
chip_gen: v7x
topology: tpu7x:2x2x1
jax: 0.10.0
libtpu: 0.0.40
codegen_flags: <defaults>
</compile_context>

<pallas_src>
import functools

import jax
import jax.numpy as jnp
from jax.experimental import pallas as pl
from jax.experimental.pallas import tpu as pltpu


def _simple_att_kernel(x_ref, w_in_ref, b_in_ref, w_att_ref, w_cls_ref, out_ref,
                       *, t_valid):
    bb, t, d = x_ref.shape
    a = w_in_ref.shape[1]

    # x stays in its storage dtype (f32 or bf16) — the MXU consumes it directly
    # with f32 accumulation; no blanket upcast.
    x = x_ref[...]                                         # (BB, T, D)
    x2 = x.reshape(bb * t, d)                              # layout-preserving (T % 8 == 0)

    # v = tanh(x @ W_in^T + b_in): one MXU matmul with M = BB*T; tanh runs on
    # the f32 accumulator (only the dot inputs may be sub-f32 — v5e-safe).
    pre = jnp.dot(x2, w_in_ref[...],
                  preferred_element_type=jnp.float32,
                  precision=jax.lax.Precision.HIGHEST)     # (BB*T, A) f32
    v = jnp.tanh(pre + b_in_ref[...].astype(jnp.float32))

    # Attention scores vu = v . w_att — broadcast multiply + lane reduce
    # (avoids an N=1 MXU matmul).
    vu = jnp.sum(v.reshape(bb, t, a) * w_att_ref[...].astype(jnp.float32),
                 axis=-1)                                  # (BB, T) f32

    # Mask sequence positions that only exist because T was padded to a
    # multiple of 8 in the wrapper.
    if t != t_valid:
        t_idx = jax.lax.broadcasted_iota(jnp.int32, (bb, t), 1)
        vu = jnp.where(t_idx < t_valid, vu, jnp.float32(-1e30))

    # Row-wise softmax over T.  Exact reciprocal: the previous approx=True EUP
    # reciprocal caused the ~3e-4 mismatch against the reference.
    m = jnp.max(vu, axis=-1, keepdims=True)
    e = jnp.exp(vu - m)
    alphas = e / jnp.sum(e, axis=-1, keepdims=True)        # (BB, T) f32

    # Weighted pooling over T (VPU multiply + f32 reduce).  The f32 temp is as
    # large as the x block; the wrapper's VMEM budget accounts for it.
    # TODO(synk): chunk the T reduction / add a T-tiled online-softmax grid
    # axis for very large T*D blocks on v7x's 64 MiB VMEM.
    pooled = jnp.sum(alphas[:, :, None] * x.astype(jnp.float32), axis=1)  # (BB, D)

    # Classifier: one (BB, D) @ (D, C_pad) matmul; lane-dense unmasked store.
    logits = jnp.dot(pooled, w_cls_ref[...],
                     preferred_element_type=jnp.float32,
                     precision=jax.lax.Precision.HIGHEST)  # (BB, C_pad) f32

    out_ref[...] = logits.astype(out_ref.dtype)


def _vmem_budget():
    """(per-buffer x-block cap, vmem_limit_bytes), sized per generation when the
    chip can be queried, otherwise with v7x-safe (64 MiB VMEM) defaults."""
    block_cap, vmem_limit = 6 << 20, 48 << 20               # safe on v7x
    try:
        if pltpu.get_tpu_info().vmem_capacity_bytes >= (96 << 20):
            block_cap, vmem_limit = 14 << 20, 96 << 20      # v5e / v6e (128 MiB)
    except Exception:
        pass
    return block_cap, vmem_limit


def _choose_block_b(B, row_bytes, block_cap, min_grid_steps=1):
    """Rows of x per grid step: either the whole batch (single step, any B) or a
    multiple of 8 (so the (block_b, C_pad) output block satisfies the (8,128)
    tiling rule on multi-step grids).  No batch padding is needed — Pallas
    handles the ragged last block and masks out-of-range writes."""
    max_rows = max(1, block_cap // max(row_bytes, 1))
    if min_grid_steps > 1 and B >= 8 * min_grid_steps:      # v7x: spread over 2 TCs
        max_rows = min(max_rows, B // min_grid_steps)
    if B <= max_rows:
        return B
    bb = (min(max_rows, B) // 8) * 8
    if bb == 0:
        # Even 8 rows exceed the per-buffer cap; accept the overshoot.
        # TODO(synk): sequence(T)-tiled online-softmax fallback for huge T*D.
        bb = min(8, B)
    return bb


@functools.partial(jax.jit, static_argnames=("min_grid_steps",))
def simple_att_layer(x, w_in, b_in, w_att, w_cls, *, min_grid_steps=1):
    """x: (B,T,D); w_in: (A,D); b_in: (1,A); w_att: (A,1); w_cls: (C,D).
    Returns float32 logits of shape (B, C).

    Feed x / w_in as bfloat16 to halve HBM traffic (accumulation stays f32).
    Set min_grid_steps=2 on v7x to share the batch across both TensorCores.
    """
    B, T, D = x.shape
    A = w_in.shape[0]
    C = w_cls.shape[0]

    # Pad T to a multiple of 8 so in-kernel reshapes stay layout-preserving;
    # padded positions are masked to -1e30 before the softmax in the kernel.
    T_pad = ((T + 7) // 8) * 8
    if T_pad != T:
        x = jnp.pad(x, ((0, 0), (0, T_pad - T), (0, 0)))

    # One-time wrapper-side layout work (tiny vs. streaming x):
    w_in_da = w_in.T.astype(x.dtype)                         # (D, A), matches x dtype
    b_in_row = jnp.reshape(b_in, (1, A)).astype(jnp.float32)
    w_att_row = jnp.reshape(w_att, (1, A)).astype(jnp.float32)
    c_pad = ((C + 127) // 128) * 128                         # lane-dense output columns
    w_cls_dc = jnp.zeros((D, c_pad), jnp.float32).at[:, :C].set(
        w_cls.T.astype(jnp.float32))

    itemsize = jnp.dtype(x.dtype).itemsize
    block_cap, vmem_limit = _vmem_budget()
    block_b = _choose_block_b(B, T_pad * D * itemsize, block_cap, min_grid_steps)
    grid_b = pl.cdiv(B, block_b)     # ragged last block handled in-pipeline, no jnp.pad of x

    flops = (2 * B * T_pad * D * A        # first matmul
             + 2 * B * T_pad * A          # attention scores
             + 2 * B * T_pad * D          # pooling
             + 2 * B * D * c_pad)         # classifier
    bytes_accessed = (x.size * itemsize + w_in_da.size * itemsize
                      + (b_in_row.size + w_att_row.size + w_cls_dc.size) * 4
                      + B * c_pad * 4)
    cost = pl.CostEstimate(flops=flops,
                           transcendentals=2 * B * T_pad,    # tanh + exp
                           bytes_accessed=bytes_accessed)

    kernel = functools.partial(_simple_att_kernel, t_valid=T)

    out = pl.pallas_call(
        kernel,
        out_shape=jax.ShapeDtypeStruct((B, c_pad), jnp.float32),
        grid_spec=pltpu.PrefetchScalarGridSpec(
            num_scalar_prefetch=0,
            grid=(grid_b,),
            in_specs=[
                pl.BlockSpec((block_b, T_pad, D), lambda b: (b, 0, 0)),  # x tile
                # TODO(synk): pipeline_mode=pl.Buffered(1) on the grid-constant
                # weight specs would halve their VMEM footprint for large D.
                pl.BlockSpec((D, A), lambda b: (0, 0)),                  # W_in^T
                pl.BlockSpec((1, A), lambda b: (0, 0)),                  # b_in
                pl.BlockSpec((1, A), lambda b: (0, 0)),                  # w_att^T
                pl.BlockSpec((D, c_pad), lambda b: (0, 0)),              # W_cls^T, padded
            ],
            out_specs=pl.BlockSpec((block_b, c_pad), lambda b: (b, 0)),
        ),
        compiler_params=pltpu.CompilerParams(
            dimension_semantics=("parallel",),
            vmem_limit_bytes=vmem_limit,
        ),
        cost_estimate=cost,
    )(x, w_in_da, b_in_row, w_att_row, w_cls_dc)

    return out[:, :C]


def _reference(x, w_in, b_in, w_att, w_cls):
    # Pure-JAX replica of the PyTorch forward for verification.
    v = jnp.tanh(jnp.einsum("btd,ad->bta", x, w_in) + b_in[0])      # (B, T, A)
    vu = jnp.einsum("bta,a->bt", v, w_att[:, 0])                    # (B, T)
    alphas = jax.nn.softmax(vu, axis=-1)                            # (B, T)
    pooled = jnp.einsum("bt,btd->bd", alphas, x)                    # (B, D)
    return jnp.einsum("bd,cd->bc", pooled, w_cls)                   # (B, C)


if __name__ == "__main__":
    # Small shapes consistent with the module's forward.
    B, T = 2, 8            # batch, sequence length
    D = 32                 # in_features
    A = 16                 # attention_size
    C = 4                  # n_class

    key = jax.random.PRNGKey(0)
    kx, k1, k2, k3, k4 = jax.random.split(key, 5)

    x = jax.random.normal(kx, (B, T, D), dtype=jnp.float32)

    # PyTorch Linear weight layout: (out, in).
    w_in = jax.random.normal(k1, (A, D), dtype=jnp.float32) * 0.1   # input_linear.weight
    b_in = jax.random.normal(k2, (1, A), dtype=jnp.float32) * 0.1   # input_linear.bias
    w_att = jax.random.normal(k3, (A, 1), dtype=jnp.float32) * 0.1  # att.weight^T (no bias)
    w_cls = jax.random.normal(k4, (C, D), dtype=jnp.float32) * 0.1  # classifier.weight (no bias)

    logits = simple_att_layer(x, w_in, b_in, w_att, w_cls)
    logits = jax.block_until_ready(logits)

    ref = _reference(x, w_in, b_in, w_att, w_cls)
    assert logits.shape == (B, C), logits.shape
    # Exact softmax reciprocal + HIGHEST-precision f32 contraction -> errors are
    # ~1e-6; tolerance keeps margin for per-generation EUP tanh/exp variants.
    assert jnp.allclose(logits, ref, atol=5e-4, rtol=5e-4), (
        f"mismatch: max err {jnp.max(jnp.abs(logits - ref))}"
    )

    print("KERNEL_OK")
</pallas_src>

<mosaic_0001>
module attributes {stable_mosaic.version = 11 : i64} {
  func.func @_simple_att_kernel(%arg0: i32, %arg1: memref<2x8x32xf32, #tpu.memory_space<vmem>>, %arg2: memref<32x16xf32, #tpu.memory_space<vmem>>, %arg3: memref<1x16xf32, #tpu.memory_space<vmem>>, %arg4: memref<1x16xf32, #tpu.memory_space<vmem>>, %arg5: memref<32x128xf32, #tpu.memory_space<vmem>>, %arg6: memref<2x128xf32, #tpu.memory_space<vmem>>) attributes {dimension_semantics = [#tpu.dimension_semantics<parallel>], iteration_bounds = array<i64: 1>, scalar_prefetch = 0 : i64, scratch_operands = 0 : i64, tpu.core_type = #tpu.core_type<tc>, window_params = [{transform_indices = @transform_0, window_bounds = array<i64: 2, 8, 32>}, {pipeline_mode = #tpu.pipeline_mode<synchronous>, transform_indices = @transform_1, window_bounds = array<i64: 32, 16>}, {pipeline_mode = #tpu.pipeline_mode<synchronous>, transform_indices = @transform_2, window_bounds = array<i64: 1, 16>}, {pipeline_mode = #tpu.pipeline_mode<synchronous>, transform_indices = @transform_3, window_bounds = array<i64: 1, 16>}, {pipeline_mode = #tpu.pipeline_mode<synchronous>, transform_indices = @transform_4, window_bounds = array<i64: 32, 128>}, {transform_indices = @transform_5, window_bounds = array<i64: 2, 128>}]} {
    %c0 = arith.constant 0 : index
    %c0_0 = arith.constant 0 : index
    %c0_1 = arith.constant 0 : index
    %0 = vector.load %arg1[%c0, %c0_0, %c0_1] : memref<2x8x32xf32, #tpu.memory_space<vmem>>, vector<2x8x32xf32>
    %1 = vector.shape_cast %0 : vector<2x8x32xf32> to vector<16x32xf32>
    %c0_2 = arith.constant 0 : index
    %c0_3 = arith.constant 0 : index
    %2 = vector.load %arg2[%c0_2, %c0_3] : memref<32x16xf32, #tpu.memory_space<vmem>>, vector<32x16xf32>
    %cst = arith.constant dense<0.000000e+00> : vector<16x16xf32>
    %3 = tpu.matmul %1, %2, %cst {dimension_numbers = #tpu.dot_dimension_numbers<[1], [0], [0], [1], [0, 0, 1, 1], [], []>, precision = #tpu.contract_precision<fp32>} : vector<16x32xf32>, vector<32x16xf32>, vector<16x16xf32> -> vector<16x16xf32>
    %c0_4 = arith.constant 0 : index
    %c0_5 = arith.constant 0 : index
    %4 = vector.load %arg3[%c0_4, %c0_5] : memref<1x16xf32, #tpu.memory_space<vmem>>, vector<1x16xf32>
    %5 = vector.broadcast %4 : vector<1x16xf32> to vector<16x16xf32>
    %6 = arith.addf %3, %5 : vector<16x16xf32>
    %7 = math.tanh %6 : vector<16x16xf32>
    %8 = vector.shape_cast %7 : vector<16x16xf32> to vector<2x8x16xf32>
    %c0_6 = arith.constant 0 : index
    %c0_7 = arith.constant 0 : index
    %9 = vector.load %arg4[%c0_6, %c0_7] : memref<1x16xf32, #tpu.memory_space<vmem>>, vector<1x16xf32>
    %10 = vector.shape_cast %9 : vector<1x16xf32> to vector<1x1x16xf32>
    %11 = vector.broadcast %10 : vector<1x1x16xf32> to vector<2x8x16xf32>
    %12 = arith.mulf %8, %11 : vector<2x8x16xf32>
    %cst_8 = arith.constant dense<0.000000e+00> : vector<2x8xf32>
    %13 = vector.multi_reduction <add>, %12, %cst_8 [2] : vector<2x8x16xf32> to vector<2x8xf32>
    %cst_9 = arith.constant dense<0xFF800000> : vector<2xf32>
    %14 = vector.multi_reduction <maximumf>, %13, %cst_9 [1] : vector<2x8xf32> to vector<2xf32>
    %15 = vector.shape_cast %14 : vector<2xf32> to vector<2x1xf32>
    %16 = vector.broadcast %15 : vector<2x1xf32> to vector<2x8xf32>
    %17 = arith.subf %13, %16 : vector<2x8xf32>
    %18 = math.exp %17 : vector<2x8xf32>
    %cst_10 = arith.constant dense<0.000000e+00> : vector<2xf32>
    %19 = vector.multi_reduction <add>, %18, %cst_10 [1] : vector<2x8xf32> to vector<2xf32>
    %20 = vector.shape_cast %19 : vector<2xf32> to vector<2x1xf32>
    %21 = vector.broadcast %20 : vector<2x1xf32> to vector<2x8xf32>
    %22 = arith.divf %18, %21 : vector<2x8xf32>
    %23 = vector.shape_cast %22 : vector<2x8xf32> to vector<2x8x1xf32>
    %24 = vector.broadcast %23 : vector<2x8x1xf32> to vector<2x8x32xf32>
    %25 = arith.mulf %24, %0 : vector<2x8x32xf32>
    %cst_11 = arith.constant dense<0.000000e+00> : vector<2x32xf32>
    %26 = vector.multi_reduction <add>, %25, %cst_11 [1] : vector<2x8x32xf32> to vector<2x32xf32>
    %c0_12 = arith.constant 0 : index
    %c0_13 = arith.constant 0 : index
    %27 = vector.load %arg5[%c0_12, %c0_13] : memref<32x128xf32, #tpu.memory_space<vmem>>, vector<32x128xf32>
    %cst_14 = arith.constant dense<0.000000e+00> : vector<2x128xf32>
    %28 = tpu.matmul %26, %27, %cst_14 {dimension_numbers = #tpu.dot_dimension_numbers<[1], [0], [0], [1], [0, 0, 1, 1], [], []>, precision = #tpu.contract_precision<fp32>} : vector<2x32xf32>, vector<32x128xf32>, vector<2x128xf32> -> vector<2x128xf32>
    %c0_15 = arith.constant 0 : index
    %c0_16 = arith.constant 0 : index
    %29 = vector.load %arg6[%c0_15, %c0_16] : memref<2x128xf32, #tpu.memory_space<vmem>>, vector<2x128xf32>
    tpu.vector_store %arg6[%c0_15, %c0_16], %28 {strides = array<i32>} : memref<2x128xf32, #tpu.memory_space<vmem>>, vector<2x128xf32>,
    return
  }
  func.func @transform_0(%arg0: i32) -> (i32, i32, i32) {
    %c0_i32 = arith.constant 0 : i32
    %c0_i32_0 = arith.constant 0 : i32
    %c0_i32_1 = arith.constant 0 : i32
    return %arg0, %c0_i32, %c0_i32_0 : i32, i32, i32
  }
  func.func @transform_1(%arg0: i32) -> (i32, i32) {
    %c0_i32 = arith.constant 0 : i32
    %c0_i32_0 = arith.constant 0 : i32
    %c0_i32_1 = arith.constant 0 : i32
    return %c0_i32, %c0_i32_0 : i32, i32
  }
  func.func @transform_2(%arg0: i32) -> (i32, i32) {
    %c0_i32 = arith.constant 0 : i32
    %c0_i32_0 = arith.constant 0 : i32
    %c0_i32_1 = arith.constant 0 : i32
    return %c0_i32, %c0_i32_0 : i32, i32
  }
  func.func @transform_3(%arg0: i32) -> (i32, i32) {
    %c0_i32 = arith.constant 0 : i32
    %c0_i32_0 = arith.constant 0 : i32
    %c0_i32_1 = arith.constant 0 : i32
    return %c0_i32, %c0_i32_0 : i32, i32
  }
  func.func @transform_4(%arg0: i32) -> (i32, i32) {
    %c0_i32 = arith.constant 0 : i32
    %c0_i32_0 = arith.constant 0 : i32
    %c0_i32_1 = arith.constant 0 : i32
    return %c0_i32, %c0_i32_0 : i32, i32
  }
  func.func @transform_5(%arg0: i32) -> (i32, i32) {
    %c0_i32 = arith.constant 0 : i32
    %c0_i32_0 = arith.constant 0 : i32
    return %arg0, %c0_i32 : i32, i32
  }
}

</mosaic_0001>

<llo_original>
// kernel: simple_att_layer.1
$region0: #{simple_att_layer.1}
  #allocation0 [shape = 'u32[]', space=smem, size = 0x4, offset = 0x4, fixed_abs, tag = 'smem constant byte address 0x4 - core index']
  #allocation1 [shape = 'u32[144,128]{1,0:T(1,128)}', space=vmem, size = 0x12000, scoped, tag = 'internal scratch']
  %s0 = inlined_call_operand.vmem [shape: f32[2,8,32], index: 0, kind: input, shape index: {}]
  %s1 = inlined_call_operand.vmem [shape: f32[32,16], index: 1, kind: input, shape index: {}]
  %s2 = inlined_call_operand.vmem [shape: f32[1,16], index: 2, kind: input, shape index: {}]
  %s3 = inlined_call_operand.vmem [shape: f32[1,16], index: 3, kind: input, shape index: {}]
  %s4 = inlined_call_operand.vmem [shape: f32[32,128], index: 4, kind: input, shape index: {}]
  %s5 = inlined_call_operand.hbm [shape: f32[2,128], index: 5, kind: output, shape index: {}]
  %s6 = sld [smem:[#allocation0]]
  $region30: #{simple_att_layer.1} parent=0
    _
  %s8 = ssub.s32 1, %s6
  %s9 = scalar_select 0, %s8, %s6
  $region1: #{simple_att_layer.1} parent=0
    #allocation2 [shape = 'u8[1024]{0}', space=vmem, size = 0x400, scoped, tag = 'output window, operand 0, single buffered']
    #allocation3 [shape = 's32[1]{0}', space=sflag, size = 0x4, scoped, tag = 'scoped memory for simple_att_layer.1']
    %10 = vsyncpa [#allocation3], 0
    // Predicated region
    $region2: #{simple_att_layer.1} parent=1 // pred_check
      _
    $region3: #{simple_att_layer.1} parent=1 // pred_check_branch
      %12 = sbr.rel (0) target = $region5
    $region4: #{simple_att_layer.1} parent=1 // pred_region
      _
    $region5: #{simple_att_layer.1} parent=1 // pred_fallthru
      _
    // Predicated region
    $region6: #{simple_att_layer.1} parent=1 // pred_check
      _
    $region7: #{simple_att_layer.1} parent=1 // pred_check_branch
      %14 = sbr.rel (0) target = $region9
    $region8: #{simple_att_layer.1} parent=1 // pred_region
      _
    $region9: #{simple_att_layer.1} parent=1 // pred_fallthru
      _
    // Predicated region
    $region10: #{simple_att_layer.1} parent=1 // pred_check
      _
    $region11: #{simple_att_layer.1} parent=1 // pred_check_branch
      %16 = sbr.rel (0) target = $region13
    $region12: #{simple_att_layer.1} parent=1 // pred_region
      _
    $region13: #{simple_att_layer.1} parent=1 // pred_fallthru
      _
    // Predicated region
    $region14: #{simple_att_layer.1} parent=1 // pred_check
      _
    $region15: #{simple_att_layer.1} parent=1 // pred_check_branch
      %18 = sbr.rel (0) target = $region17
    $region16: #{simple_att_layer.1} parent=1 // pred_region
      _
    $region17: #{simple_att_layer.1} parent=1 // pred_fallthru
      _
    // Predicated region
    $region18: #{simple_att_layer.1} parent=1 // pred_check
      _
    $region19: #{simple_att_layer.1} parent=1 // pred_check_branch
      %20 = sbr.rel (0) target = $region21
    $region20: #{simple_att_layer.1} parent=1 // pred_region
      _
    $region21: #{simple_att_layer.1} parent=1 // pred_fallthru
      _
    %v21 = vld [vmem:[%s0] sm:$0xff]
    %v22 = vld [vmem:[%s0 + $0x8] sm:$0xff]
    %v23 = vld [vmem:[%s1] sm:$0xff]
    %v24 = vld [vmem:[%s1 + $0x8] sm:$0xff]
    %v25 = vld [vmem:[%s1 + $0x10] sm:$0xff]
    %v26 = vld [vmem:[%s1 + $0x18] sm:$0xff]
    %v27 = vld [vmem:[%s2] sm:$0x1]
    %v29 = vlaneseq
    %v30 = vshrl.u32 %v29, 7
    %v31 = vsub.s32 0, %v30
    %v32 = vrot.slane %v27, %v31
    %vm34 = vcmask 261120
    %v36 = vsel %vm34, %v21, 0
    %v39 = vsel %vm34, %v22, 0
    %41 = vmatprep.subr.mxu0 0.0
    %v42 = vand.u32 %v23, 4294901760
    %43 = vmatpush1.msra.mxu0 %v42
    %44 = vmatprep.subr.mxu0 0.0
    %v45 = vand.u32 %v24, 4294901760
    %46 = vmatpush1.msra.mxu0 %v45
    %47 = vmatprep.subr.mxu0 0.0
    %v48 = vand.u32 %v25, 4294901760
    %49 = vmatpush1.msra.mxu0 %v48
    %50 = vmatprep.subr.mxu0 0.0
    %v51 = vand.u32 %v26, 4294901760
    %52 = vmatpush1.msra.mxu0 %v51
    %53 = vmatprep.subr.mxu0 0.0
    %54 = vmatpush1.msra.mxu0 0.0
    %55 = vmatprep.subr.mxu0 0.0
    %56 = vmatpush1.msra.mxu0 0.0
    %57 = vmatprep.subr.mxu0 0.0
    %58 = vmatpush1.msra.mxu0 0.0
    %59 = vmatprep.subr.mxu0 0.0
    %60 = vmatpush1.msra.mxu0 0.0
    %61 = vmatprep.subr.mxu0 0.0
    %62 = vmatpush1.msra.mxu0 0.0
    %63 = vmatprep.subr.mxu0 0.0
    %64 = vmatpush1.msra.mxu0 0.0
    %65 = vmatprep.subr.mxu0 0.0
    %66 = vmatpush1.msra.mxu0 0.0
    %67 = vmatprep.subr.mxu0 0.0
    %68 = vmatpush1.msra.mxu0 0.0
    %69 = vmatprep.subr.mxu0 0.0
    %70 = vmatpush1.msra.mxu0 0.0
    %71 = vmatprep.subr.mxu0 0.0
    %72 = vmatpush1.msra.mxu0 0.0
    %73 = vmatprep.subr.mxu0 0.0
    %74 = vmatpush1.msra.mxu0 0.0
    %75 = vmatprep.subr.mxu0 0.0
    %76 = vmatpush1.msra.mxu0 0.0
    %77 = vmatprep.subr.mxu0 0.0
    %78 = vmatpush1.msra.mxu0 0.0
    %79 = vmatprep.subr.mxu0 0.0
    %80 = vmatpush1.msra.mxu0 0.0
    %81 = vmatprep.subr.mxu0 0.0
    %82 = vmatpush1.msra.mxu0 0.0
    %83 = vmatprep.subr.mxu0 0.0
    %84 = vmatpush1.msra.mxu0 0.0
    %85 = vmatprep.subr.mxu0 0.0
    %86 = vmatpush1.msra.mxu0 0.0
    %87 = vmatprep.subr.mxu0 0.0
    %88 = vmatpush1.msra.mxu0 0.0
    %89 = vmatprep.subr.mxu0 0.0
    %90 = vmatpush1.msra.mxu0 0.0
    %91 = vmatprep.subr.mxu0 0.0
    %92 = vmatpush1.msra.mxu0 0.0
    %93 = vmatprep.subr.mxu0 0.0
    %94 = vmatpush1.msra.mxu0 0.0
    %95 = vmatprep.subr.mxu0 0.0
    %96 = vmatpush1.msra.mxu0 0.0
    %97 = vmatprep.subr.mxu0 0.0
    %98 = vmatpush1.msra.mxu0 0.0
    %99 = vmatprep.subr.mxu0 0.0
    %100 = vmatpush1.msra.mxu0 0.0
    %101 = vmatprep.subr.mxu0 0.0
    %102 = vmatpush1.msra.mxu0 0.0
    %103 = vmatprep.subr.mxu0 0.0
    %104 = vmatpush1.msra.mxu0 0.0
    %105 = vmatprep.subr.mxu0 0.0
    %106 = vmatpush1.msra.mxu0 0.0
    %107 = vmatprep.subr.mxu0 0.0
    %108 = vmatpush1.msra.mxu0 0.0
    %109 = vmatprep.mubr.f32.mxu0 0.0
    %v110 = vand.u32 %v36, 4294901760
    %v111 = vsub.f32 %v36, %v110
    %v112 = vand.u32 %v111, 4294901760
    %v113 = vsub.f32 %v111, %v112
    %v114 = vand.u32 %v113, 4294901760
    %115 = vmatmul.mubr.f32.gmra.mrb[0].mxu0 %v114
    %v116 = vpop.f32.mrb[0].mxu0
    %v117 = vadd.f32 %v32, %v116
    %v118 = vpop.f32.mrb[0].mxu0
    %119 = vmatprep.mubr.f32.mxu0 0.0
    %v120 = vand.u32 %v39, 4294901760
    %v121 = vsub.f32 %v39, %v120
    %v122 = vand.u32 %v121, 4294901760
    %v123 = vsub.f32 %v121, %v122
    %v124 = vand.u32 %v123, 4294901760
    %125 = vmatmul.mubr.f32.gmra.mrb[0].mxu0 %v124
    %v126 = vpop.f32.mrb[0].mxu0
    %v127 = vadd.f32 %v32, %v126
    %v128 = vpop.f32.mrb[0].mxu0
    %129 = vdwg.mxu0
    %130 = vmatprep.subr.mxu0 0.0
    %v131 = vand.u32 %v23, 4294901760
    %v132 = vsub.f32 %v23, %v131
    %v133 = vand.u32 %v132, 4294901760
    %v134 = vsub.f32 %v132, %v133
    %v135 = vand.u32 %v134, 4294901760
    %136 = vmatpush1.msra.mxu0 %v135
    %137 = vmatprep.subr.mxu0 0.0
    %v138 = vand.u32 %v24, 4294901760
    %v139 = vsub.f32 %v24, %v138
    %v140 = vand.u32 %v139, 4294901760
    %v141 = vsub.f32 %v139, %v140
    %v142 = vand.u32 %v141, 4294901760
    %143 = vmatpush1.msra.mxu0 %v142
    %144 = vmatprep.subr.mxu0 0.0
    %v145 = vand.u32 %v25, 4294901760
    %v146 = vsub.f32 %v25, %v145
    %v147 = vand.u32 %v146, 4294901760
    %v148 = vsub.f32 %v146, %v147
    %v149 = vand.u32 %v148, 4294901760
    %150 = vmatpush1.msra.mxu0 %v149
    %151 = vmatprep.subr.mxu0 0.0
    %v152 = vand.u32 %v26, 4294901760
    %v153 = vsub.f32 %v26, %v152
    %v154 = vand.u32 %v153, 4294901760
    %v155 = vsub.f32 %v153, %v154
    %v156 = vand.u32 %v155, 4294901760
    %157 = vmatpush1.msra.mxu0 %v156
    %158 = vmatprep.subr.mxu0 0.0
    %159 = vmatpush1.msra.mxu0 0.0
    %160 = vmatprep.subr.mxu0 0.0
    %161 = vmatpush1.msra.mxu0 0.0
    %162 = vmatprep.subr.mxu0 0.0
    %163 = vmatpush1.msra.mxu0 0.0
    %164 = vmatprep.subr.mxu0 0.0
    %165 = vmatpush1.msra.mxu0 0.0
    %166 = vmatprep.subr.mxu0 0.0
    %167 = vmatpush1.msra.mxu0 0.0
    %168 = vmatprep.subr.mxu0 0.0
    %169 = vmatpush1.msra.mxu0 0.0
    %170 = vmatprep.subr.mxu0 0.0
    %171 = vmatpush1.msra.mxu0 0.0
    %172 = vmatprep.subr.mxu0 0.0
    %173 = vmatpush1.msra.mxu0 0.0
    %174 = vmatprep.subr.mxu0 0.0
    %175 = vmatpush1.msra.mxu0 0.0
    %176 = vmatprep.subr.mxu0 0.0
    %177 = vmatpush1.msra.mxu0 0.0
    %178 = vmatprep.subr.mxu0 0.0
    %179 = vmatpush1.msra.mxu0 0.0
    %180 = vmatprep.subr.mxu0 0.0
    %181 = vmatpush1.msra.mxu0 0.0
    %182 = vmatprep.subr.mxu0 0.0
    %183 = vmatpush1.msra.mxu0 0.0
    %184 = vmatprep.subr.mxu0 0.0
    %185 = vmatpush1.msra.mxu0 0.0
    %186 = vmatprep.subr.mxu0 0.0
    %187 = vmatpush1.msra.mxu0 0.0
    %188 = vmatprep.subr.mxu0 0.0
    %189 = vmatpush1.msra.mxu0 0.0
    %190 = vmatprep.subr.mxu0 0.0
    %191 = vmatpush1.msra.mxu0 0.0
    %192 = vmatprep.subr.mxu0 0.0
    %193 = vmatpush1.msra.mxu0 0.0
    %194 = vmatprep.subr.mxu0 0.0
    %195 = vmatpush1.msra.mxu0 0.0
    %196 = vmatprep.subr.mxu0 0.0
    %197 = vmatpush1.msra.mxu0 0.0
    %198 = vmatprep.subr.mxu0 0.0
    %199 = vmatpush1.msra.mxu0 0.0
    %200 = vmatprep.subr.mxu0 0.0
    %201 = vmatpush1.msra.mxu0 0.0
    %202 = vmatprep.subr.mxu0 0.0
    %203 = vmatpush1.msra.mxu0 0.0
    %204 = vmatprep.subr.mxu0 0.0
    %205 = vmatpush1.msra.mxu0 0.0
    %206 = vmatprep.subr.mxu0 0.0
    %207 = vmatpush1.msra.mxu0 0.0
    %208 = vmatprep.subr.mxu0 0.0
    %209 = vmatpush1.msra.mxu0 0.0
    %210 = vmatprep.subr.mxu0 0.0
    %211 = vmatpush1.msra.mxu0 0.0
    %212 = vmatprep.subr.mxu0 0.0
    %213 = vmatpush1.msra.mxu0 0.0
    %214 = vmatprep.mubr.f32.mxu0 0.0
    %v215 = vand.u32 %v36, 4294901760
    %216 = vmatmul.mubr.f32.gmra.mrb[0].mxu0 %v215
    %v217 = vpop.f32.mrb[0].mxu0
    %v218 = vadd.f32 %v117, %v217
    %v219 = vpop.f32.mrb[0].mxu0
    %220 = vmatprep.mubr.f32.mxu0 0.0
    %v221 = vand.u32 %v39, 4294901760
    %222 = vmatmul.mubr.f32.gmra.mrb[0].mxu0 %v221
    %v223 = vpop.f32.mrb[0].mxu0
    %v224 = vadd.f32 %v127, %v223
    %v225 = vpop.f32.mrb[0].mxu0
    %226 = vdwg.mxu0
    %227 = vmatprep.subr.mxu0 0.0
    %v228 = vand.u32 %v23, 4294901760
    %v229 = vsub.f32 %v23, %v228
    %230 = vmatpush1.msra.mxu0 %v229
    %231 = vmatprep.subr.mxu0 0.0
    %v232 = vand.u32 %v24, 4294901760
    %v233 = vsub.f32 %v24, %v232
    %234 = vmatpush1.msra.mxu0 %v233
    %235 = vmatprep.subr.mxu0 0.0
    %v236 = vand.u32 %v25, 4294901760
    %v237 = vsub.f32 %v25, %v236
    %238 = vmatpush1.msra.mxu0 %v237
    %239 = vmatprep.subr.mxu0 0.0
    %v240 = vand.u32 %v26, 4294901760
    %v241 = vsub.f32 %v26, %v240
    %242 = vmatpush1.msra.mxu0 %v241
    %243 = vmatprep.subr.mxu0 0.0
    %244 = vmatpush1.msra.mxu0 0.0
    %245 = vmatprep.subr.mxu0 0.0
    %246 = vmatpush1.msra.mxu0 0.0
    %247 = vmatprep.subr.mxu0 0.0
    %248 = vmatpush1.msra.mxu0 0.0
    %249 = vmatprep.subr.mxu0 0.0
    %250 = vmatpush1.msra.mxu0 0.0
    %251 = vmatprep.subr.mxu0 0.0
    %252 = vmatpush1.msra.mxu0 0.0
    %253 = vmatprep.subr.mxu0 0.0
    %254 = vmatpush1.msra.mxu0 0.0
    %255 = vmatprep.subr.mxu0 0.0
    %256 = vmatpush1.msra.mxu0 0.0
    %257 = vmatprep.subr.mxu0 0.0
    %258 = vmatpush1.msra.mxu0 0.0
    %259 = vmatprep.subr.mxu0 0.0
    %260 = vmatpush1.msra.mxu0 0.0
    %261 = vmatprep.subr.mxu0 0.0
    %262 = vmatpush1.msra.mxu0 0.0
    %263 = vmatprep.subr.mxu0 0.0
    %264 = vmatpush1.msra.mxu0 0.0
    %265 = vmatprep.subr.mxu0 0.0
    %266 = vmatpush1.msra.mxu0 0.0
    %267 = vmatprep.subr.mxu0 0.0
    %268 = vmatpush1.msra.mxu0 0.0
    %269 = vmatprep.subr.mxu0 0.0
    %270 = vmatpush1.msra.mxu0 0.0
    %271 = vmatprep.subr.mxu0 0.0
    %272 = vmatpush1.msra.mxu0 0.0
    %273 = vmatprep.subr.mxu0 0.0
    %274 = vmatpush1.msra.mxu0 0.0
    %275 = vmatprep.subr.mxu0 0.0
    %276 = vmatpush1.msra.mxu0 0.0
    %277 = vmatprep.subr.mxu0 0.0
    %278 = vmatpush1.msra.mxu0 0.0
    %279 = vmatprep.subr.mxu0 0.0
    %280 = vmatpush1.msra.mxu0 0.0
    %281 = vmatprep.subr.mxu0 0.0
    %282 = vmatpush1.msra.mxu0 0.0
    %283 = vmatprep.subr.mxu0 0.0
    %284 = vmatpush1.msra.mxu0 0.0
    %285 = vmatprep.subr.mxu0 0.0
    %286 = vmatpush1.msra.mxu0 0.0
    %287 = vmatprep.subr.mxu0 0.0
    %288 = vmatpush1.msra.mxu0 0.0
    %289 = vmatprep.subr.mxu0 0.0
    %290 = vmatpush1.msra.mxu0 0.0
    %291 = vmatprep.subr.mxu0 0.0
    %292 = vmatpush1.msra.mxu0 0.0
    %293 = vmatprep.subr.mxu0 0.0
    %294 = vmatpush1.msra.mxu0 0.0
    %295 = vmatprep.subr.mxu0 0.0
    %296 = vmatpush1.msra.mxu0 0.0
    %297 = vmatprep.subr.mxu0 0.0
    %298 = vmatpush1.msra.mxu0 0.0
    %299 = vmatprep.mubr.f32.mxu0 0.0
    %v300 = vand.u32 %v36, 4294901760
    %v301 = vsub.f32 %v36, %v300
    %302 = vmatmul.mubr.f32.gmra.mrb[0].mxu0 %v301
    %v303 = vpop.f32.mrb[0].mxu0
    %v304 = vadd.f32 %v218, %v303
    %v305 = vpop.f32.mrb[0].mxu0
    %306 = vmatprep.mubr.f32.mxu0 0.0
    %v307 = vand.u32 %v39, 4294901760
    %v308 = vsub.f32 %v39, %v307
    %309 = vmatmul.mubr.f32.gmra.mrb[0].mxu0 %v308
    %v310 = vpop.f32.mrb[0].mxu0
    %v311 = vadd.f32 %v224, %v310
    %v312 = vpop.f32.mrb[0].mxu0
    %313 = vdwg.mxu0
    %314 = vmatprep.subr.mxu0 0.0
    %v315 = vand.u32 %v23, 4294901760
    %316 = vmatpush1.msra.mxu0 %v315
    %317 = vmatprep.subr.mxu0 0.0
    %v318 = vand.u32 %v24, 4294901760
    %319 = vmatpush1.msra.mxu0 %v318
    %320 = vmatprep.subr.mxu0 0.0
    %v321 = vand.u32 %v25, 4294901760
    %322 = vmatpush1.msra.mxu0 %v321
    %323 = vmatprep.subr.mxu0 0.0
    %v324 = vand.u32 %v26, 4294901760
    %325 = vmatpush1.msra.mxu0 %v324
    %326 = vmatprep.subr.mxu0 0.0
    %327 = vmatpush1.msra.mxu0 0.0
    %328 = vmatprep.subr.mxu0 0.0
    %329 = vmatpush1.msra.mxu0 0.0
    %330 = vmatprep.subr.mxu0 0.0
    %331 = vmatpush1.msra.mxu0 0.0
    %332 = vmatprep.subr.mxu0 0.0
    %333 = vmatpush1.msra.mxu0 0.0
    %334 = vmatprep.subr.mxu0 0.0
    %335 = vmatpush1.msra.mxu0 0.0
    %336 = vmatprep.subr.mxu0 0.0
    %337 = vmatpush1.msra.mxu0 0.0
    %338 = vmatprep.subr.mxu0 0.0
    %339 = vmatpush1.msra.mxu0 0.0
    %340 = vmatprep.subr.mxu0 0.0
    %341 = vmatpush1.msra.mxu0 0.0
    %342 = vmatprep.subr.mxu0 0.0
    %343 = vmatpush1.msra.mxu0 0.0
    %344 = vmatprep.subr.mxu0 0.0
    %345 = vmatpush1.msra.mxu0 0.0
    %346 = vmatprep.subr.mxu0 0.0
    %347 = vmatpush1.msra.mxu0 0.0
    %348 = vmatprep.subr.mxu0 0.0
    %349 = vmatpush1.msra.mxu0 0.0
    %350 = vmatprep.subr.mxu0 0.0
    %351 = vmatpush1.msra.mxu0 0.0
    %352 = vmatprep.subr.mxu0 0.0
    %353 = vmatpush1.msra.mxu0 0.0
    %354 = vmatprep.subr.mxu0 0.0
    %355 = vmatpush1.msra.mxu0 0.0
    %356 = vmatprep.subr.mxu0 0.0
    %357 = vmatpush1.msra.mxu0 0.0
    %358 = vmatprep.subr.mxu0 0.0
    %359 = vmatpush1.msra.mxu0 0.0
    %360 = vmatprep.subr.mxu0 0.0
    %361 = vmatpush1.msra.mxu0 0.0
    %362 = vmatprep.subr.mxu0 0.0
    %363 = vmatpush1.msra.mxu0 0.0
    %364 = vmatprep.subr.mxu0 0.0
    %365 = vmatpush1.msra.mxu0 0.0
    %366 = vmatprep.subr.mxu0 0.0
    %367 = vmatpush1.msra.mxu0 0.0
    %368 = vmatprep.subr.mxu0 0.0
    %369 = vmatpush1.msra.mxu0 0.0
    %370 = vmatprep.subr.mxu0 0.0
    %371 = vmatpush1.msra.mxu0 0.0
    %372 = vmatprep.subr.mxu0 0.0
    %373 = vmatpush1.msra.mxu0 0.0
    %374 = vmatprep.subr.mxu0 0.0
    %375 = vmatpush1.msra.mxu0 0.0
    %376 = vmatprep.subr.mxu0 0.0
    %377 = vmatpush1.msra.mxu0 0.0
    %378 = vmatprep.subr.mxu0 0.0
    %379 = vmatpush1.msra.mxu0 0.0
    %380 = vmatprep.subr.mxu0 0.0
    %381 = vmatpush1.msra.mxu0 0.0
    %382 = vmatprep.mubr.f32.mxu0 0.0
    %v383 = vand.u32 %v36, 4294901760
    %v384 = vsub.f32 %v36, %v383
    %v385 = vand.u32 %v384, 4294901760
    %386 = vmatmul.mubr.f32.gmra.mrb[0].mxu0 %v385
    %v387 = vpop.f32.mrb[0].mxu0
    %v388 = vadd.f32 %v304, %v387
    %v389 = vpop.f32.mrb[0].mxu0
    %390 = vmatprep.mubr.f32.mxu0 0.0
    %v391 = vand.u32 %v39, 4294901760
    %v392 = vsub.f32 %v39, %v391
    %v393 = vand.u32 %v392, 4294901760
    %394 = vmatmul.mubr.f32.gmra.mrb[0].mxu0 %v393
    %v395 = vpop.f32.mrb[0].mxu0
    %v396 = vadd.f32 %v311, %v395
    %v397 = vpop.f32.mrb[0].mxu0
    %398 = vdwg.mxu0
    %399 = vmatprep.subr.mxu0 0.0
    %v400 = vand.u32 %v23, 4294901760
    %v401 = vsub.f32 %v23, %v400
    %v402 = vand.u32 %v401, 4294901760
    %403 = vmatpush1.msra.mxu0 %v402
    %404 = vmatprep.subr.mxu0 0.0
    %v405 = vand.u32 %v24, 4294901760
    %v406 = vsub.f32 %v24, %v405
    %v407 = vand.u32 %v406, 4294901760
    %408 = vmatpush1.msra.mxu0 %v407
    %409 = vmatprep.subr.mxu0 0.0
    %v410 = vand.u32 %v25, 4294901760
    %v411 = vsub.f32 %v25, %v410
    %v412 = vand.u32 %v411, 4294901760
    %413 = vmatpush1.msra.mxu0 %v412
    %414 = vmatprep.subr.mxu0 0.0
    %v415 = vand.u32 %v26, 4294901760
    %v416 = vsub.f32 %v26, %v415
    %v417 = vand.u32 %v416, 4294901760
    %418 = vmatpush1.msra.mxu0 %v417
    %419 = vmatprep.subr.mxu0 0.0
    %420 = vmatpush1.msra.mxu0 0.0
    %421 = vmatprep.subr.mxu0 0.0
    %422 = vmatpush1.msra.mxu0 0.0
    %423 = vmatprep.subr.mxu0 0.0
    %424 = vmatpush1.msra.mxu0 0.0
    %425 = vmatprep.subr.mxu0 0.0
    %426 = vmatpush1.msra.mxu0 0.0
    %427 = vmatprep.subr.mxu0 0.0
    %428 = vmatpush1.msra.mxu0 0.0
    %429 = vmatprep.subr.mxu0 0.0
    %430 = vmatpush1.msra.mxu0 0.0
    %431 = vmatprep.subr.mxu0 0.0
    %432 = vmatpush1.msra.mxu0 0.0
    %433 = vmatprep.subr.mxu0 0.0
    %434 = vmatpush1.msra.mxu0 0.0
    %435 = vmatprep.subr.mxu0 0.0
    %436 = vmatpush1.msra.mxu0 0.0
    %437 = vmatprep.subr.mxu0 0.0
    %438 = vmatpush1.msra.mxu0 0.0
    %439 = vmatprep.subr.mxu0 0.0
    %440 = vmatpush1.msra.mxu0 0.0
    %441 = vmatprep.subr.mxu0 0.0
    %442 = vmatpush1.msra.mxu0 0.0
    %443 = vmatprep.subr.mxu0 0.0
    %444 = vmatpush1.msra.mxu0 0.0
    %445 = vmatprep.subr.mxu0 0.0
    %446 = vmatpush1.msra.mxu0 0.0
    %447 = vmatprep.subr.mxu0 0.0
    %448 = vmatpush1.msra.mxu0 0.0
    %449 = vmatprep.subr.mxu0 0.0
    %450 = vmatpush1.msra.mxu0 0.0
    %451 = vmatprep.subr.mxu0 0.0
    %452 = vmatpush1.msra.mxu0 0.0
    %453 = vmatprep.subr.mxu0 0.0
    %454 = vmatpush1.msra.mxu0 0.0
    %455 = vmatprep.subr.mxu0 0.0
    %456 = vmatpush1.msra.mxu0 0.0
    %457 = vmatprep.subr.mxu0 0.0
    %458 = vmatpush1.msra.mxu0 0.0
    %459 = vmatprep.subr.mxu0 0.0
    %460 = vmatpush1.msra.mxu0 0.0
    %461 = vmatprep.subr.mxu0 0.0
    %462 = vmatpush1.msra.mxu0 0.0
    %463 = vmatprep.subr.mxu0 0.0
    %464 = vmatpush1.msra.mxu0 0.0
    %465 = vmatprep.subr.mxu0 0.0
    %466 = vmatpush1.msra.mxu0 0.0
    %467 = vmatprep.subr.mxu0 0.0
    %468 = vmatpush1.msra.mxu0 0.0
    %469 = vmatprep.subr.mxu0 0.0
    %470 = vmatpush1.msra.mxu0 0.0
    %471 = vmatprep.subr.mxu0 0.0
    %472 = vmatpush1.msra.mxu0 0.0
    %473 = vmatprep.subr.mxu0 0.0
    %474 = vmatpush1.msra.mxu0 0.0
    %475 = vmatprep.mubr.f32.mxu0 0.0
    %v476 = vand.u32 %v36, 4294901760
    %477 = vmatmul.mubr.f32.gmra.mrb[0].mxu0 %v476
    %v478 = vpop.f32.mrb[0].mxu0
    %v479 = vadd.f32 %v388, %v478
    %v480 = vpop.f32.mrb[0].mxu0
    %481 = vmatprep.mubr.f32.mxu0 0.0
    %v482 = vand.u32 %v39, 4294901760
    %483 = vmatmul.mubr.f32.gmra.mrb[0].mxu0 %v482
    %v484 = vpop.f32.mrb[0].mxu0
    %v485 = vadd.f32 %v396, %v484
    %v486 = vpop.f32.mrb[0].mxu0
    %487 = vdwg.mxu0
    %488 = vmatprep.subr.mxu0 0.0
    %v489 = vand.u32 %v23, 4294901760
    %490 = vmatpush1.msra.mxu0 %v489
    %491 = vmatprep.subr.mxu0 0.0
    %v492 = vand.u32 %v24, 4294901760
    %493 = vmatpush1.msra.mxu0 %v492
    %494 = vmatprep.subr.mxu0 0.0
    %v495 = vand.u32 %v25, 4294901760
    %496 = vmatpush1.msra.mxu0 %v495
    %497 = vmatprep.subr.mxu0 0.0
    %v498 = vand.u32 %v26, 4294901760
    %499 = vmatpush1.msra.mxu0 %v498
    %500 = vmatprep.subr.mxu0 0.0
    %501 = vmatpush1.msra.mxu0 0.0
    %502 = vmatprep.subr.mxu0 0.0
    %503 = vmatpush1.msra.mxu0 0.0
    %504 = vmatprep.subr.mxu0 0.0
    %505 = vmatpush1.msra.mxu0 0.0
    %506 = vmatprep.subr.mxu0 0.0
    %507 = vmatpush1.msra.mxu0 0.0
    %508 = vmatprep.subr.mxu0 0.0
    %509 = vmatpush1.msra.mxu0 0.0
    %510 = vmatprep.subr.mxu0 0.0
    %511 = vmatpush1.msra.mxu0 0.0
    %512 = vmatprep.subr.mxu0 0.0
    %513 = vmatpush1.msra.mxu0 0.0
    %514 = vmatprep.subr.mxu0 0.0
    %515 = vmatpush1.msra.mxu0 0.0
    %516 = vmatprep.subr.mxu0 0.0
    %517 = vmatpush1.msra.mxu0 0.0
    %518 = vmatprep.subr.mxu0 0.0
    %519 = vmatpush1.msra.mxu0 0.0
    %520 = vmatprep.subr.mxu0 0.0
    %521 = vmatpush1.msra.mxu0 0.0
    %522 = vmatprep.subr.mxu0 0.0
    %523 = vmatpush1.msra.mxu0 0.0
    %524 = vmatprep.subr.mxu0 0.0
    %525 = vmatpush1.msra.mxu0 0.0
    %526 = vmatprep.subr.mxu0 0.0
    %527 = vmatpush1.msra.mxu0 0.0
    %528 = vmatprep.subr.mxu0 0.0
    %529 = vmatpush1.msra.mxu0 0.0
    %530 = vmatprep.subr.mxu0 0.0
    %531 = vmatpush1.msra.mxu0 0.0
    %532 = vmatprep.subr.mxu0 0.0
    %533 = vmatpush1.msra.mxu0 0.0
    %534 = vmatprep.subr.mxu0 0.0
    %535 = vmatpush1.msra.mxu0 0.0
    %536 = vmatprep.subr.mxu0 0.0
    %537 = vmatpush1.msra.mxu0 0.0
    %538 = vmatprep.subr.mxu0 0.0
    %539 = vmatpush1.msra.mxu0 0.0
    %540 = vmatprep.subr.mxu0 0.0
    %541 = vmatpush1.msra.mxu0 0.0
    %542 = vmatprep.subr.mxu0 0.0
    %543 = vmatpush1.msra.mxu0 0.0
    %544 = vmatprep.subr.mxu0 0.0
    %545 = vmatpush1.msra.mxu0 0.0
    %546 = vmatprep.subr.mxu0 0.0
    %547 = vmatpush1.msra.mxu0 0.0
    %548 = vmatprep.subr.mxu0 0.0
    %549 = vmatpush1.msra.mxu0 0.0
    %550 = vmatprep.subr.mxu0 0.0
    %551 = vmatpush1.msra.mxu0 0.0
    %552 = vmatprep.subr.mxu0 0.0
    %553 = vmatpush1.msra.mxu0 0.0
    %554 = vmatprep.subr.mxu0 0.0
    %555 = vmatpush1.msra.mxu0 0.0
    %556 = vmatprep.mubr.f32.mxu0 0.0
    %v557 = vand.u32 %v36, 4294901760
    %558 = vmatmul.mubr.f32.gmra.mrb[0].mxu0 %v557
    %v559 = vpop.f32.mrb[0].mxu0
    %v560 = vadd.f32 %v479, %v559
    %v561 = vpop.f32.mrb[0].mxu0
    %562 = vmatprep.mubr.f32.mxu0 0.0
    %v563 = vand.u32 %v39, 4294901760
    %564 = vmatmul.mubr.f32.gmra.mrb[0].mxu0 %v563
    %v565 = vpop.f32.mrb[0].mxu0
    %v566 = vadd.f32 %v485, %v565
    %v567 = vpop.f32.mrb[0].mxu0
    %568 = vdwg.mxu0
    %v569 = vtanh.pop %v560
    %v570 = vtanh.pop %v566
    %v571 = vld [vmem:[%s3] sm:$0x1]
    %v573 = vlaneseq
    %v574 = vshrl.u32 %v573, 7
    %v575 = vsub.s32 0, %v574
    %v576 = vrot.slane %v571, %v575
    %v578 = vmul.f32 %v569, %v576
    %v579 = vmul.f32 %v570, %v576
    %vm580 = vcmask 130048
    %v581 = vsel %vm580, %v578, 0.0
    %582 = vadd.xlane.f32.xlu0 %v581
    %v583 = vpop.xlane.xlu0 %582
    %v584 = vsel %vm580, %v579, 0.0
    %585 = vadd.xlane.f32.xlu0 %v584
    %v586 = vpop.xlane.xlu0 %585
    %v589 = vlaneseq
    %v590 = vand.u32 %v589, 127
    %v591 = vlaneseq
    %v592 = vshrl.u32 %v591, 7
    %v593 = vsub.s32 %v590, %v592
    %v594 = vrot.slane %v583, %v593
    %v595 = vlaneseq
    %v596 = vshrl.u32 %v595, 7
    %v597 = vsub.s32 %v590, %v596
    %v598 = vrot.slane %v586, %v597
    %vm599 = vcmask 1041409
    %v600 = vsel %vm599, %v598, %v594
    %vm602 = vcmask 58368
    %v603 = vsel %vm602, %v600, -inf
    %604 = vmax.xlane.f32.xlu0 %v603
    %v605 = vpop.xlane.xlu0 %604
    %v607 = vlaneseq
    %v608 = vshrl.u32 %v607, 7
    %v609 = vsub.s32 0, %v608
    %v610 = vrot.slane %v605, %v609
    %v611 = vlaneseq
    %v612 = vshrl.u32 %v611, 7
    %v613 = vsub.s32 1, %v612
    %v614 = vrot.slane %v605, %v613
    %v617 = vsub.f32 %v583, %v610
    %v618 = vsub.f32 %v586, %v614
    %v619 = vmul.f32 %v617, 1.442695
    %v620 = vpow.pop %v619
    %v621 = vmul.f32 %v618, 1.442695
    %v622 = vpow.pop %v621
    %625 = vset.pattern.permute.xlu0 0
    %626 = vperm.xlu0 %625, %v620
    %v627 = vpop.permute.xlu0 %626
    %628 = vset.pattern.permute.xlu0 0
    %629 = vperm.xlu0 %628, %v622
    %v630 = vpop.permute.xlu0 %629
    %v631 = vlaneseq
    %v632 = vshrl.u32 %v631, 7
    %v633 = vsub.s32 %v590, %v632
    %v634 = vrot.slane %v627, %v633
    %v635 = vlaneseq
    %v636 = vshrl.u32 %v635, 7
    %v637 = vsub.s32 %v590, %v636
    %v638 = vrot.slane %v630, %v637
    %v639 = vsel %vm599, %v638, %v634
    %v641 = vsel %vm602, %v639, 0.0
    %642 = vadd.xlane.f32.xlu0 %v641
    %v643 = vpop.xlane.xlu0 %642
    %v645 = vlaneseq
    %v646 = vshrl.u32 %v645, 7
    %v647 = vsub.s32 0, %v646
    %v648 = vrot.slane %v643, %v647
    %v649 = vlaneseq
    %v650 = vshrl.u32 %v649, 7
    %v651 = vsub.s32 1, %v650
    %v652 = vrot.slane %v643, %v651
    %v655 = vrcp.pop %v648
    %v656 = vmul.f32 %v620, %v655
    %v657 = vrcp.pop %v652
    %v658 = vmul.f32 %v622, %v657
    %660 = vset.pattern.permute.xlu0 0
    %661 = vperm.xlu0 %660, %v656
    %v662 = vpop.permute.xlu0 %661
    %665 = vset.pattern.permute.xlu0 0
    %666 = vperm.xlu0 %665, %v658
    %v667 = vpop.permute.xlu0 %666
    %v669 = vmul.f32 %v662, %v21
    %v670 = vmul.f32 %v667, %v22
    %v671 = vsel %vm34, %v669, 0.0
    %v672 = vrot.slane %v671, 4
    %v673 = vadd.f32 %v671, %v672
    %v674 = vrot.slane %v673, 2
    %v675 = vadd.f32 %v673, %v674
    %v676 = vrot.slane %v675, 1
    %v677 = vadd.f32 %v675, %v676
    %v678 = vsel %vm34, %v670, 0.0
    %v679 = vrot.slane %v678, 4
    %v680 = vadd.f32 %v678, %v679
    %v681 = vrot.slane %v680, 2
    %v682 = vadd.f32 %v680, %v681
    %v683 = vrot.slane %v682, 1
    %v684 = vadd.f32 %v682, %v683
    %v685 = vld [vmem:[%s4] sm:$0xff]
    %v686 = vld [vmem:[%s4 + $0x8] sm:$0xff]
    %v687 = vld [vmem:[%s4 + $0x10] sm:$0xff]
    %v688 = vld [vmem:[%s4 + $0x18] sm:$0xff]
    %v691 = vsel %vm599, %v684, %v677
    %v692 = vsel %vm34, %v691, 0
    %694 = vmatprep.subr.mxu0 0.0
    %v695 = vand.u32 %v685, 4294901760
    %696 = vmatpush1.msra.mxu0 %v695
    %697 = vmatprep.subr.mxu0 0.0
    %v698 = vand.u32 %v686, 4294901760
    %699 = vmatpush1.msra.mxu0 %v698
    %700 = vmatprep.subr.mxu0 0.0
    %v701 = vand.u32 %v687, 4294901760
    %702 = vmatpush1.msra.mxu0 %v701
    %703 = vmatprep.subr.mxu0 0.0
    %v704 = vand.u32 %v688, 4294901760
    %705 = vmatpush1.msra.mxu0 %v704
    %706 = vmatprep.subr.mxu0 0.0
    %707 = vmatpush1.msra.mxu0 0.0
    %708 = vmatprep.subr.mxu0 0.0
    %709 = vmatpush1.msra.mxu0 0.0
    %710 = vmatprep.subr.mxu0 0.0
    %711 = vmatpush1.msra.mxu0 0.0
    %712 = vmatprep.subr.mxu0 0.0
    %713 = vmatpush1.msra.mxu0 0.0
    %714 = vmatprep.subr.mxu0 0.0
    %715 = vmatpush1.msra.mxu0 0.0
    %716 = vmatprep.subr.mxu0 0.0
    %717 = vmatpush1.msra.mxu0 0.0
    %718 = vmatprep.subr.mxu0 0.0
    %719 = vmatpush1.msra.mxu0 0.0
    %720 = vmatprep.subr.mxu0 0.0
    %721 = vmatpush1.msra.mxu0 0.0
    %722 = vmatprep.subr.mxu0 0.0
    %723 = vmatpush1.msra.mxu0 0.0
    %724 = vmatprep.subr.mxu0 0.0
    %725 = vmatpush1.msra.mxu0 0.0
    %726 = vmatprep.subr.mxu0 0.0
    %727 = vmatpush1.msra.mxu0 0.0
    %728 = vmatprep.subr.mxu0 0.0
    %729 = vmatpush1.msra.mxu0 0.0
    %730 = vmatprep.subr.mxu0 0.0
    %731 = vmatpush1.msra.mxu0 0.0
    %732 = vmatprep.subr.mxu0 0.0
    %733 = vmatpush1.msra.mxu0 0.0
    %734 = vmatprep.subr.mxu0 0.0
    %735 = vmatpush1.msra.mxu0 0.0
    %736 = vmatprep.subr.mxu0 0.0
    %737 = vmatpush1.msra.mxu0 0.0
    %738 = vmatprep.subr.mxu0 0.0
    %739 = vmatpush1.msra.mxu0 0.0
    %740 = vmatprep.subr.mxu0 0.0
    %741 = vmatpush1.msra.mxu0 0.0
    %742 = vmatprep.subr.mxu0 0.0
    %743 = vmatpush1.msra.mxu0 0.0
    %744 = vmatprep.subr.mxu0 0.0
    %745 = vmatpush1.msra.mxu0 0.0
    %746 = vmatprep.subr.mxu0 0.0
    %747 = vmatpush1.msra.mxu0 0.0
    %748 = vmatprep.subr.mxu0 0.0
    %749 = vmatpush1.msra.mxu0 0.0
    %750 = vmatprep.subr.mxu0 0.0
    %751 = vmatpush1.msra.mxu0 0.0
    %752 = vmatprep.subr.mxu0 0.0
    %753 = vmatpush1.msra.mxu0 0.0
    %754 = vmatprep.subr.mxu0 0.0
    %755 = vmatpush1.msra.mxu0 0.0
    %756 = vmatprep.subr.mxu0 0.0
    %757 = vmatpush1.msra.mxu0 0.0
    %758 = vmatprep.subr.mxu0 0.0
    %759 = vmatpush1.msra.mxu0 0.0
    %760 = vmatprep.subr.mxu0 0.0
    %761 = vmatpush1.msra.mxu0 0.0
    %762 = vmatprep.mubr.f32.mxu0 0.0
    %v763 = vand.u32 %v692, 4294901760
    %v764 = vsub.f32 %v692, %v763
    %v765 = vand.u32 %v764, 4294901760
    %v766 = vsub.f32 %v764, %v765
    %v767 = vand.u32 %v766, 4294901760
    %768 = vmatmul.mubr.f32.gmra.mrb[0].mxu0 %v767
    %v769 = vpop.f32.mrb[0].mxu0
    %v770 = vadd.f32 0.0, %v769
    %v771 = vpop.f32.mrb[0].mxu0
    %772 = vdwg.mxu0
    %773 = vmatprep.subr.mxu0 0.0
    %v774 = vand.u32 %v685, 4294901760
    %v775 = vsub.f32 %v685, %v774
    %v776 = vand.u32 %v775, 4294901760
    %v777 = vsub.f32 %v775, %v776
    %v778 = vand.u32 %v777, 4294901760
    %779 = vmatpush1.msra.mxu0 %v778
    %780 = vmatprep.subr.mxu0 0.0
    %v781 = vand.u32 %v686, 4294901760
    %v782 = vsub.f32 %v686, %v781
    %v783 = vand.u32 %v782, 4294901760
    %v784 = vsub.f32 %v782, %v783
    %v785 = vand.u32 %v784, 4294901760
    %786 = vmatpush1.msra.mxu0 %v785
    %787 = vmatprep.subr.mxu0 0.0
    %v788 = vand.u32 %v687, 4294901760
    %v789 = vsub.f32 %v687, %v788
    %v790 = vand.u32 %v789, 4294901760
    %v791 = vsub.f32 %v789, %v790
    %v792 = vand.u32 %v791, 4294901760
    %793 = vmatpush1.msra.mxu0 %v792
    %794 = vmatprep.subr.mxu0 0.0
    %v795 = vand.u32 %v688, 4294901760
    %v796 = vsub.f32 %v688, %v795
    %v797 = vand.u32 %v796, 4294901760
    %v798 = vsub.f32 %v796, %v797
    %v799 = vand.u32 %v798, 4294901760
    %800 = vmatpush1.msra.mxu0 %v799
    %801 = vmatprep.subr.mxu0 0.0
    %802 = vmatpush1.msra.mxu0 0.0
    %803 = vmatprep.subr.mxu0 0.0
    %804 = vmatpush1.msra.mxu0 0.0
    %805 = vmatprep.subr.mxu0 0.0
    %806 = vmatpush1.msra.mxu0 0.0
    %807 = vmatprep.subr.mxu0 0.0
    %808 = vmatpush1.msra.mxu0 0.0
    %809 = vmatprep.subr.mxu0 0.0
    %810 = vmatpush1.msra.mxu0 0.0
    %811 = vmatprep.subr.mxu0 0.0
    %812 = vmatpush1.msra.mxu0 0.0
    %813 = vmatprep.subr.mxu0 0.0
    %814 = vmatpush1.msra.mxu0 0.0
    %815 = vmatprep.subr.mxu0 0.0
    %816 = vmatpush1.msra.mxu0 0.0
    %817 = vmatprep.subr.mxu0 0.0
    %818 = vmatpush1.msra.mxu0 0.0
    %819 = vmatprep.subr.mxu0 0.0
    %820 = vmatpush1.msra.mxu0 0.0
    %821 = vmatprep.subr.mxu0 0.0
    %822 = vmatpush1.msra.mxu0 0.0
    %823 = vmatprep.subr.mxu0 0.0
    %824 = vmatpush1.msra.mxu0 0.0
    %825 = vmatprep.subr.mxu0 0.0
    %826 = vmatpush1.msra.mxu0 0.0
    %827 = vmatprep.subr.mxu0 0.0
    %828 = vmatpush1.msra.mxu0 0.0
    %829 = vmatprep.subr.mxu0 0.0
    %830 = vmatpush1.msra.mxu0 0.0
    %831 = vmatprep.subr.mxu0 0.0
    %832 = vmatpush1.msra.mxu0 0.0
    %833 = vmatprep.subr.mxu0 0.0
    %834 = vmatpush1.msra.mxu0 0.0
    %835 = vmatprep.subr.mxu0 0.0
    %836 = vmatpush1.msra.mxu0 0.0
    %837 = vmatprep.subr.mxu0 0.0
    %838 = vmatpush1.msra.mxu0 0.0
    %839 = vmatprep.subr.mxu0 0.0
    %840 = vmatpush1.msra.mxu0 0.0
    %841 = vmatprep.subr.mxu0 0.0
    %842 = vmatpush1.msra.mxu0 0.0
    %843 = vmatprep.subr.mxu0 0.0
    %844 = vmatpush1.msra.mxu0 0.0
    %845 = vmatprep.subr.mxu0 0.0
    %846 = vmatpush1.msra.mxu0 0.0
    %847 = vmatprep.subr.mxu0 0.0
    %848 = vmatpush1.msra.mxu0 0.0
    %849 = vmatprep.subr.mxu0 0.0
    %850 = vmatpush1.msra.mxu0 0.0
    %851 = vmatprep.subr.mxu0 0.0
    %852 = vmatpush1.msra.mxu0 0.0
    %853 = vmatprep.subr.mxu0 0.0
    %854 = vmatpush1.msra.mxu0 0.0
    %855 = vmatprep.subr.mxu0 0.0
    %856 = vmatpush1.msra.mxu0 0.0
    %857 = vmatprep.mubr.f32.mxu0 0.0
    %v858 = vand.u32 %v692, 4294901760
    %859 = vmatmul.mubr.f32.gmra.mrb[0].mxu0 %v858
    %v860 = vpop.f32.mrb[0].mxu0
    %v861 = vadd.f32 %v770, %v860
    %v862 = vpop.f32.mrb[0].mxu0
    %863 = vdwg.mxu0
    %864 = vmatprep.subr.mxu0 0.0
    %v865 = vand.u32 %v685, 4294901760
    %v866 = vsub.f32 %v685, %v865
    %867 = vmatpush1.msra.mxu0 %v866
    %868 = vmatprep.subr.mxu0 0.0
    %v869 = vand.u32 %v686, 4294901760
    %v870 = vsub.f32 %v686, %v869
    %871 = vmatpush1.msra.mxu0 %v870
    %872 = vmatprep.subr.mxu0 0.0
    %v873 = vand.u32 %v687, 4294901760
    %v874 = vsub.f32 %v687, %v873
    %875 = vmatpush1.msra.mxu0 %v874
    %876 = vmatprep.subr.mxu0 0.0
    %v877 = vand.u32 %v688, 4294901760
    %v878 = vsub.f32 %v688, %v877
    %879 = vmatpush1.msra.mxu0 %v878
    %880 = vmatprep.subr.mxu0 0.0
    %881 = vmatpush1.msra.mxu0 0.0
    %882 = vmatprep.subr.mxu0 0.0
    %883 = vmatpush1.msra.mxu0 0.0
    %884 = vmatprep.subr.mxu0 0.0
    %885 = vmatpush1.msra.mxu0 0.0
    %886 = vmatprep.subr.mxu0 0.0
    %887 = vmatpush1.msra.mxu0 0.0
    %888 = vmatprep.subr.mxu0 0.0
    %889 = vmatpush1.msra.mxu0 0.0
    %890 = vmatprep.subr.mxu0 0.0
    %891 = vmatpush1.msra.mxu0 0.0
    %892 = vmatprep.subr.mxu0 0.0
    %893 = vmatpush1.msra.mxu0 0.0
    %894 = vmatprep.subr.mxu0 0.0
    %895 = vmatpush1.msra.mxu0 0.0
    %896 = vmatprep.subr.mxu0 0.0
    %897 = vmatpush1.msra.mxu0 0.0
    %898 = vmatprep.subr.mxu0 0.0
    %899 = vmatpush1.msra.mxu0 0.0
    %900 = vmatprep.subr.mxu0 0.0
    %901 = vmatpush1.msra.mxu0 0.0
    %902 = vmatprep.subr.mxu0 0.0
    %903 = vmatpush1.msra.mxu0 0.0
    %904 = vmatprep.subr.mxu0 0.0
    %905 = vmatpush1.msra.mxu0 0.0
    %906 = vmatprep.subr.mxu0 0.0
    %907 = vmatpush1.msra.mxu0 0.0
    %908 = vmatprep.subr.mxu0 0.0
    %909 = vmatpush1.msra.mxu0 0.0
    %910 = vmatprep.subr.mxu0 0.0
    %911 = vmatpush1.msra.mxu0 0.0
    %912 = vmatprep.subr.mxu0 0.0
    %913 = vmatpush1.msra.mxu0 0.0
    %914 = vmatprep.subr.mxu0 0.0
    %915 = vmatpush1.msra.mxu0 0.0
    %916 = vmatprep.subr.mxu0 0.0
    %917 = vmatpush1.msra.mxu0 0.0
    %918 = vmatprep.subr.mxu0 0.0
    %919 = vmatpush1.msra.mxu0 0.0
    %920 = vmatprep.subr.mxu0 0.0
    %921 = vmatpush1.msra.mxu0 0.0
    %922 = vmatprep.subr.mxu0 0.0
    %923 = vmatpush1.msra.mxu0 0.0
    %924 = vmatprep.subr.mxu0 0.0
    %925 = vmatpush1.msra.mxu0 0.0
    %926 = vmatprep.subr.mxu0 0.0
    %927 = vmatpush1.msra.mxu0 0.0
    %928 = vmatprep.subr.mxu0 0.0
    %929 = vmatpush1.msra.mxu0 0.0
    %930 = vmatprep.subr.mxu0 0.0
    %931 = vmatpush1.msra.mxu0 0.0
    %932 = vmatprep.subr.mxu0 0.0
    %933 = vmatpush1.msra.mxu0 0.0
    %934 = vmatprep.subr.mxu0 0.0
    %935 = vmatpush1.msra.mxu0 0.0
    %936 = vmatprep.mubr.f32.mxu0 0.0
    %v937 = vand.u32 %v692, 4294901760
    %v938 = vsub.f32 %v692, %v937
    %939 = vmatmul.mubr.f32.gmra.mrb[0].mxu0 %v938
    %v940 = vpop.f32.mrb[0].mxu0
    %v941 = vadd.f32 %v861, %v940
    %v942 = vpop.f32.mrb[0].mxu0
    %943 = vdwg.mxu0
    %944 = vmatprep.subr.mxu0 0.0
    %v945 = vand.u32 %v685, 4294901760
    %946 = vmatpush1.msra.mxu0 %v945
    %947 = vmatprep.subr.mxu0 0.0
    %v948 = vand.u32 %v686, 4294901760
    %949 = vmatpush1.msra.mxu0 %v948
    %950 = vmatprep.subr.mxu0 0.0
    %v951 = vand.u32 %v687, 4294901760
    %952 = vmatpush1.msra.mxu0 %v951
    %953 = vmatprep.subr.mxu0 0.0
    %v954 = vand.u32 %v688, 4294901760
    %955 = vmatpush1.msra.mxu0 %v954
    %956 = vmatprep.subr.mxu0 0.0
    %957 = vmatpush1.msra.mxu0 0.0
    %958 = vmatprep.subr.mxu0 0.0
    %959 = vmatpush1.msra.mxu0 0.0
    %960 = vmatprep.subr.mxu0 0.0
    %961 = vmatpush1.msra.mxu0 0.0
    %962 = vmatprep.subr.mxu0 0.0
    %963 = vmatpush1.msra.mxu0 0.0
    %964 = vmatprep.subr.mxu0 0.0
    %965 = vmatpush1.msra.mxu0 0.0
    %966 = vmatprep.subr.mxu0 0.0
    %967 = vmatpush1.msra.mxu0 0.0
    %968 = vmatprep.subr.mxu0 0.0
    %969 = vmatpush1.msra.mxu0 0.0
    %970 = vmatprep.subr.mxu0 0.0
    %971 = vmatpush1.msra.mxu0 0.0
    %972 = vmatprep.subr.mxu0 0.0
    %973 = vmatpush1.msra.mxu0 0.0
    %974 = vmatprep.subr.mxu0 0.0
    %975 = vmatpush1.msra.mxu0 0.0
    %976 = vmatprep.subr.mxu0 0.0
    %977 = vmatpush1.msra.mxu0 0.0
    %978 = vmatprep.subr.mxu0 0.0
    %979 = vmatpush1.msra.mxu0 0.0
    %980 = vmatprep.subr.mxu0 0.0
    %981 = vmatpush1.msra.mxu0 0.0
    %982 = vmatprep.subr.mxu0 0.0
    %983 = vmatpush1.msra.mxu0 0.0
    %984 = vmatprep.subr.mxu0 0.0
    %985 = vmatpush1.msra.mxu0 0.0
    %986 = vmatprep.subr.mxu0 0.0
    %987 = vmatpush1.msra.mxu0 0.0
    %988 = vmatprep.subr.mxu0 0.0
    %989 = vmatpush1.msra.mxu0 0.0
    %990 = vmatprep.subr.mxu0 0.0
    %991 = vmatpush1.msra.mxu0 0.0
    %992 = vmatprep.subr.mxu0 0.0
    %993 = vmatpush1.msra.mxu0 0.0
    %994 = vmatprep.subr.mxu0 0.0
    %995 = vmatpush1.msra.mxu0 0.0
    %996 = vmatprep.subr.mxu0 0.0
    %997 = vmatpush1.msra.mxu0 0.0
    %998 = vmatprep.subr.mxu0 0.0
    %999 = vmatpush1.msra.mxu0 0.0
    %1000 = vmatprep.subr.mxu0 0.0
    %1001 = vmatpush1.msra.mxu0 0.0
    %1002 = vmatprep.subr.mxu0 0.0
    %1003 = vmatpush1.msra.mxu0 0.0
    %1004 = vmatprep.subr.mxu0 0.0
    %1005 = vmatpush1.msra.mxu0 0.0
    %1006 = vmatprep.subr.mxu0 0.0
    %1007 = vmatpush1.msra.mxu0 0.0
    %1008 = vmatprep.subr.mxu0 0.0
    %1009 = vmatpush1.msra.mxu0 0.0
    %1010 = vmatprep.subr.mxu0 0.0
    %1011 = vmatpush1.msra.mxu0 0.0
    %1012 = vmatprep.mubr.f32.mxu0 0.0
    %v1013 = vand.u32 %v692, 4294901760
    %v1014 = vsub.f32 %v692, %v1013
    %v1015 = vand.u32 %v1014, 4294901760
    %1016 = vmatmul.mubr.f32.gmra.mrb[0].mxu0 %v1015
    %v1017 = vpop.f32.mrb[0].mxu0
    %v1018 = vadd.f32 %v941, %v1017
    %v1019 = vpop.f32.mrb[0].mxu0
    %1020 = vdwg.mxu0
    %1021 = vmatprep.subr.mxu0 0.0
    %v1022 = vand.u32 %v685, 4294901760
    %v1023 = vsub.f32 %v685, %v1022
    %v1024 = vand.u32 %v1023, 4294901760
    %1025 = vmatpush1.msra.mxu0 %v1024
    %1026 = vmatprep.subr.mxu0 0.0
    %v1027 = vand.u32 %v686, 4294901760
    %v1028 = vsub.f32 %v686, %v1027
    %v1029 = vand.u32 %v1028, 4294901760
    %1030 = vmatpush1.msra.mxu0 %v1029
    %1031 = vmatprep.subr.mxu0 0.0
    %v1032 = vand.u32 %v687, 4294901760
    %v1033 = vsub.f32 %v687, %v1032
    %v1034 = vand.u32 %v1033, 4294901760
    %1035 = vmatpush1.msra.mxu0 %v1034
    %1036 = vmatprep.subr.mxu0 0.0
    %v1037 = vand.u32 %v688, 4294901760
    %v1038 = vsub.f32 %v688, %v1037
    %v1039 = vand.u32 %v1038, 4294901760
    %1040 = vmatpush1.msra.mxu0 %v1039
    %1041 = vmatprep.subr.mxu0 0.0
    %1042 = vmatpush1.msra.mxu0 0.0
    %1043 = vmatprep.subr.mxu0 0.0
    %1044 = vmatpush1.msra.mxu0 0.0
    %1045 = vmatprep.subr.mxu0 0.0
    %1046 = vmatpush1.msra.mxu0 0.0
    %1047 = vmatprep.subr.mxu0 0.0
    %1048 = vmatpush1.msra.mxu0 0.0
    %1049 = vmatprep.subr.mxu0 0.0
    %1050 = vmatpush1.msra.mxu0 0.0
    %1051 = vmatprep.subr.mxu0 0.0
    %1052 = vmatpush1.msra.mxu0 0.0
    %1053 = vmatprep.subr.mxu0 0.0
    %1054 = vmatpush1.msra.mxu0 0.0
    %1055 = vmatprep.subr.mxu0 0.0
    %1056 = vmatpush1.msra.mxu0 0.0
    %1057 = vmatprep.subr.mxu0 0.0
    %1058 = vmatpush1.msra.mxu0 0.0
    %1059 = vmatprep.subr.mxu0 0.0
    %1060 = vmatpush1.msra.mxu0 0.0
    %1061 = vmatprep.subr.mxu0 0.0
    %1062 = vmatpush1.msra.mxu0 0.0
    %1063 = vmatprep.subr.mxu0 0.0
    %1064 = vmatpush1.msra.mxu0 0.0
    %1065 = vmatprep.subr.mxu0 0.0
    %1066 = vmatpush1.msra.mxu0 0.0
    %1067 = vmatprep.subr.mxu0 0.0
    %1068 = vmatpush1.msra.mxu0 0.0
    %1069 = vmatprep.subr.mxu0 0.0
    %1070 = vmatpush1.msra.mxu0 0.0
    %1071 = vmatprep.subr.mxu0 0.0
    %1072 = vmatpush1.msra.mxu0 0.0
    %1073 = vmatprep.subr.mxu0 0.0
    %1074 = vmatpush1.msra.mxu0 0.0
    %1075 = vmatprep.subr.mxu0 0.0
    %1076 = vmatpush1.msra.mxu0 0.0
    %1077 = vmatprep.subr.mxu0 0.0
    %1078 = vmatpush1.msra.mxu0 0.0
    %1079 = vmatprep.subr.mxu0 0.0
    %1080 = vmatpush1.msra.mxu0 0.0
    %1081 = vmatprep.subr.mxu0 0.0
    %1082 = vmatpush1.msra.mxu0 0.0
    %1083 = vmatprep.subr.mxu0 0.0
    %1084 = vmatpush1.msra.mxu0 0.0
    %1085 = vmatprep.subr.mxu0 0.0
    %1086 = vmatpush1.msra.mxu0 0.0
    %1087 = vmatprep.subr.mxu0 0.0
    %1088 = vmatpush1.msra.mxu0 0.0
    %1089 = vmatprep.subr.mxu0 0.0
    %1090 = vmatpush1.msra.mxu0 0.0
    %1091 = vmatprep.subr.mxu0 0.0
    %1092 = vmatpush1.msra.mxu0 0.0
    %1093 = vmatprep.subr.mxu0 0.0
    %1094 = vmatpush1.msra.mxu0 0.0
    %1095 = vmatprep.subr.mxu0 0.0
    %1096 = vmatpush1.msra.mxu0 0.0
    %1097 = vmatprep.mubr.f32.mxu0 0.0
    %v1098 = vand.u32 %v692, 4294901760
    %1099 = vmatmul.mubr.f32.gmra.mrb[0].mxu0 %v1098
    %v1100 = vpop.f32.mrb[0].mxu0
    %v1101 = vadd.f32 %v1018, %v1100
    %v1102 = vpop.f32.mrb[0].mxu0
    %1103 = vdwg.mxu0
    %1104 = vmatprep.subr.mxu0 0.0
    %v1105 = vand.u32 %v685, 4294901760
    %1106 = vmatpush1.msra.mxu0 %v1105
    %1107 = vmatprep.subr.mxu0 0.0
    %v1108 = vand.u32 %v686, 4294901760
    %1109 = vmatpush1.msra.mxu0 %v1108
    %1110 = vmatprep.subr.mxu0 0.0
    %v1111 = vand.u32 %v687, 4294901760
    %1112 = vmatpush1.msra.mxu0 %v1111
    %1113 = vmatprep.subr.mxu0 0.0
    %v1114 = vand.u32 %v688, 4294901760
    %1115 = vmatpush1.msra.mxu0 %v1114
    %1116 = vmatprep.subr.mxu0 0.0
    %1117 = vmatpush1.msra.mxu0 0.0
    %1118 = vmatprep.subr.mxu0 0.0
    %1119 = vmatpush1.msra.mxu0 0.0
    %1120 = vmatprep.subr.mxu0 0.0
    %1121 = vmatpush1.msra.mxu0 0.0
    %1122 = vmatprep.subr.mxu0 0.0
    %1123 = vmatpush1.msra.mxu0 0.0
    %1124 = vmatprep.subr.mxu0 0.0
    %1125 = vmatpush1.msra.mxu0 0.0
    %1126 = vmatprep.subr.mxu0 0.0
    %1127 = vmatpush1.msra.mxu0 0.0
    %1128 = vmatprep.subr.mxu0 0.0
    %1129 = vmatpush1.msra.mxu0 0.0
    %1130 = vmatprep.subr.mxu0 0.0
    %1131 = vmatpush1.msra.mxu0 0.0
    %1132 = vmatprep.subr.mxu0 0.0
    %1133 = vmatpush1.msra.mxu0 0.0
    %1134 = vmatprep.subr.mxu0 0.0
    %1135 = vmatpush1.msra.mxu0 0.0
    %1136 = vmatprep.subr.mxu0 0.0
    %1137 = vmatpush1.msra.mxu0 0.0
    %1138 = vmatprep.subr.mxu0 0.0
    %1139 = vmatpush1.msra.mxu0 0.0
    %1140 = vmatprep.subr.mxu0 0.0
    %1141 = vmatpush1.msra.mxu0 0.0
    %1142 = vmatprep.subr.mxu0 0.0
    %1143 = vmatpush1.msra.mxu0 0.0
    %1144 = vmatprep.subr.mxu0 0.0
    %1145 = vmatpush1.msra.mxu0 0.0
    %1146 = vmatprep.subr.mxu0 0.0
    %1147 = vmatpush1.msra.mxu0 0.0
    %1148 = vmatprep.subr.mxu0 0.0
    %1149 = vmatpush1.msra.mxu0 0.0
    %1150 = vmatprep.subr.mxu0 0.0
    %1151 = vmatpush1.msra.mxu0 0.0
    %1152 = vmatprep.subr.mxu0 0.0
    %1153 = vmatpush1.msra.mxu0 0.0
    %1154 = vmatprep.subr.mxu0 0.0
    %1155 = vmatpush1.msra.mxu0 0.0
    %1156 = vmatprep.subr.mxu0 0.0
    %1157 = vmatpush1.msra.mxu0 0.0
    %1158 = vmatprep.subr.mxu0 0.0
    %1159 = vmatpush1.msra.mxu0 0.0
    %1160 = vmatprep.subr.mxu0 0.0
    %1161 = vmatpush1.msra.mxu0 0.0
    %1162 = vmatprep.subr.mxu0 0.0
    %1163 = vmatpush1.msra.mxu0 0.0
    %1164 = vmatprep.subr.mxu0 0.0
    %1165 = vmatpush1.msra.mxu0 0.0
    %1166 = vmatprep.subr.mxu0 0.0
    %1167 = vmatpush1.msra.mxu0 0.0
    %1168 = vmatprep.subr.mxu0 0.0
    %1169 = vmatpush1.msra.mxu0 0.0
    %1170 = vmatprep.subr.mxu0 0.0
    %1171 = vmatpush1.msra.mxu0 0.0
    %1172 = vmatprep.mubr.f32.mxu0 0.0
    %v1173 = vand.u32 %v692, 4294901760
    %1174 = vmatmul.mubr.f32.gmra.mrb[0].mxu0 %v1173
    %v1175 = vpop.f32.mrb[0].mxu0
    %v1176 = vadd.f32 %v1101, %v1175
    %v1177 = vpop.f32.mrb[0].mxu0
    %1178 = vdwg.mxu0
    %1179 = vst [vmem:[#allocation2] sm:$0x3] %v1176
    // Predicated region
    $region22: #{simple_att_layer.1} parent=1 // pred_check
      _
    $region23: #{simple_att_layer.1} parent=1 // pred_check_branch
      %1181 = sbr.rel (0) target = $region25
    $region24: #{simple_att_layer.1} parent=1 // pred_region
      %s1183 = ssub.s32 32, 32
      %1184 = vsyncadd [#allocation3], %s1183
      %s1186 = sshll.u32 [#allocation2], 4
      %s1187 = int_to_ptr.vmem [resolvable:$true] %s1186
      %1189 = dma.vmem_to_hbm [thread:$0]  %s1187, 32, %s5, [#allocation3]
    $region25: #{simple_att_layer.1} parent=1 // pred_fallthru
      _
    // Predicated region
    $region26: #{simple_att_layer.1} parent=1 // pred_check
      _
    $region27: #{simple_att_layer.1} parent=1 // pred_check_branch
      %1191 = sbr.rel (0) target = $region29
    $region28: #{simple_att_layer.1} parent=1 // pred_region
      %1192 = dma.done [#allocation3], 32
    $region29: #{simple_att_layer.1} parent=1 // pred_fallthru
      _
    %1193 = vsyncpa [#allocation3], 1

</llo_original>
